<compile_context>
chip_gen: v7x
topology: tpu7x:2x2x1
jax: 0.10.0
libtpu: 0.0.40
codegen_flags: <defaults>
</compile_context>

<pallas_src>
import jax
import jax.numpy as jnp
from jax.experimental import pallas as pl
from jax.experimental.pallas import tpu as pltpu


def _round_up(x, m):
    return ((x + m - 1) // m) * m


def _vmem_capacity_bytes():
    try:
        info = pltpu.get_tpu_info()
        cap = getattr(info, "vmem_capacity_bytes", None)
        if cap:
            return int(cap)
    except Exception:
        pass
    return 64 << 20  # conservative default (v7x per-TC VMEM)


def _divisors_mult(total, step, max_val):
    """Multiples of `step` that divide `total`, descending, <= max_val."""
    out = []
    v = (max_val // step) * step
    while v >= step:
        if total % v == 0:
            out.append(v)
        v -= step
    return out


# --------------------------------------------------------------------------------------- kernels
def _lhs_direct_kernel(x_ref, adj_ref, w_ref, b_ref, o_ref):
    # out = (adj @ x) @ W + rowsum(adj) * b      (cheaper when D <= O_pad)
    x = x_ref[...]                                             # (Bt, L, D)
    adj = adj_ref[...]                                         # (Bt, tl, L)
    w = w_ref[...]                                             # (D, O_pad)
    ax = jnp.einsum("btl,bld->btd", adj, x,
                    preferred_element_type=jnp.float32)        # (Bt, tl, D) f32
    out = jnp.einsum("btd,do->bto", ax.astype(w.dtype), w,
                     preferred_element_type=jnp.float32)       # (Bt, tl, O_pad) f32
    rowsum = jnp.sum(adj, axis=-1, keepdims=True, dtype=jnp.float32)   # f32-accumulating reduce
    o_ref[...] = (out + rowsum * b_ref[...][None]).astype(o_ref.dtype)


def _lhs_ktiled_kernel(x_ref, adj_ref, w_ref, b_ref, o_ref, acc_ref, rs_ref):
    # Contraction-tiled variant: x streamed as (Bt, tk, D); f32 accumulators in VMEM scratch.
    k = pl.program_id(2)

    @pl.when(k == 0)
    def _():
        acc_ref[...] = jnp.zeros_like(acc_ref)
        rs_ref[...] = jnp.zeros_like(rs_ref)

    adj = adj_ref[...]                                         # (Bt, tl, tk)
    acc_ref[...] += jnp.einsum("btk,bkd->btd", adj, x_ref[...],
                               preferred_element_type=jnp.float32)
    rs_ref[...] += jnp.sum(adj, axis=-1, keepdims=True, dtype=jnp.float32)

    @pl.when(k == pl.num_programs(2) - 1)
    def _():
        w = w_ref[...]
        out = jnp.einsum("btd,do->bto", acc_ref[...].astype(w.dtype), w,
                         preferred_element_type=jnp.float32)
        o_ref[...] = (out + rs_ref[...] * b_ref[...][None]).astype(o_ref.dtype)


def _rhs_cached_kernel(x_ref, adj_ref, w_ref, b_ref, o_ref, sup_ref):
    # out = adj @ (x @ W + b) with `support` computed ONCE per batch tile (r == 0) into VMEM
    # scratch and reused for every row tile -- no per-row-tile recompute of the L*D*O matmul.
    @pl.when(pl.program_id(1) == 0)
    def _():
        sup = jnp.einsum("bld,do->blo", x_ref[...], w_ref[...],
                         preferred_element_type=jnp.float32)   # (Bt, L, O_pad) f32
        sup_ref[...] = (sup + b_ref[...][None]).astype(sup_ref.dtype)

    out = jnp.einsum("btl,blo->bto", adj_ref[...], sup_ref[...],
                     preferred_element_type=jnp.float32)       # (Bt, tl, O_pad) f32
    o_ref[...] = out.astype(o_ref.dtype)


# --------------------------------------------------------------------------------------- wrapper
def _vmem_bytes(path, bt, tl, tk, l_pad, d, o_pad, isz, osz):
    """Live-VMEM estimate: double-buffered blocks + scratch + f32 intermediates."""
    f32 = 4
    params = 2 * (d * o_pad * isz + 8 * o_pad * f32)           # w + bias blocks
    out_blk = 2 * bt * tl * o_pad * osz
    if path == "lhs_direct":
        x_blk = 2 * bt * l_pad * d * isz
        adj_blk = 2 * bt * tl * l_pad * isz
        inter = bt * tl * d * f32 + bt * tl * o_pad * f32      # ax + out-before-cast
        scratch = 0
    elif path == "lhs_ktiled":
        x_blk = 2 * bt * tk * d * isz
        adj_blk = 2 * bt * tl * tk * isz
        inter = bt * tl * d * f32 + bt * tl * o_pad * f32      # partial product + out
        scratch = bt * tl * d * f32 + bt * tl * 128 * f32      # acc + rowsum (lane-padded)
    else:  # "rhs_cached"
        x_blk = 2 * bt * l_pad * d * isz
        adj_blk = 2 * bt * tl * l_pad * isz
        inter = bt * l_pad * o_pad * f32 + bt * tl * o_pad * f32   # sup-before-cast + out
        scratch = bt * l_pad * o_pad * isz                         # cached support
    return params + out_blk + x_blk + adj_blk + inter + scratch


def graph_convolution(inputs, adjs, weight, bias, *, compute_dtype=None, row_tile_max=512,
                      _force_path=None, _force_tk=None):
    """GraphConvolution forward: bmm(adjs, inputs @ weight.T + bias).

    inputs: (B, L, D), adjs: (B, L, L), weight: (O, D), bias: (O,) -> (B, L, O)
    """
    inputs = jnp.asarray(inputs)
    adjs = jnp.asarray(adjs)
    weight = jnp.asarray(weight)
    bias = jnp.asarray(bias)
    out_dtype = inputs.dtype

    if compute_dtype is not None:          # optional bf16 fast path (accumulation stays f32)
        inputs = inputs.astype(compute_dtype)
    adjs = adjs.astype(inputs.dtype)       # homogeneous MXU operands (no in-kernel upcasts)
    weight = weight.astype(inputs.dtype)

    B, L, D = inputs.shape
    O = weight.shape[0]
    isz = inputs.dtype.itemsize
    osz = jnp.dtype(out_dtype).itemsize
    sub = {4: 8, 2: 16, 1: 32}.get(isz, 8)                     # sublane multiple per dtype

    O_pad = _round_up(max(O, 1), 128)                          # lane-dense output -> unmasked vst
    # TODO(synk): for tiny O (<=32), A/B a masked exact-O store against the 128-lane padded write.

    # ---- generation-aware VMEM budget (128 MiB on v5e/v6e, 64 MiB on v7x) ----------------------
    phys = _vmem_capacity_bytes()
    vmem_limit = max(32 << 20, min(int(phys * 0.80), phys - (8 << 20)))
    budget = int(phys * 0.62)

    # ---- params: pre-transpose + pad once in the wrapper ---------------------------------------
    w_p = jnp.pad(weight.T, ((0, 0), (0, O_pad - O)))                              # (D, O_pad)
    b_p = jnp.pad(bias.astype(jnp.float32), (0, O_pad - O)).reshape(1, O_pad)      # (1, O_pad)

    # ---- row tiling: prefer a tile dividing L exactly (no wrapper-side adj padding) ------------
    if L <= row_tile_max:
        L_pad = _round_up(L, sub)
        tl = L_pad
    else:
        start = max((max(row_tile_max, 128) // sub) * sub, 128)
        tl = None
        for t in range(start, 127, -sub):
            if L % t == 0:
                tl = t
                break
        if tl is None:                                          # no clean divisor: pad L
            tl = 256 if row_tile_max >= 256 else 128
            L_pad = _round_up(L, tl)
        else:
            L_pad = L

    # ---- path selection (accounts for row tiling, f32 intermediates and scratch) ---------------
    tk = L_pad
    if _force_path is not None:
        path = _force_path
    else:
        path = "rhs_cached" if D > O_pad else "lhs_direct"
        if path == "rhs_cached" and \
                _vmem_bytes("rhs_cached", 1, tl, L_pad, L_pad, D, O_pad, isz, osz) > budget:
            path = "lhs_direct"                                 # support scratch too big
        if path == "lhs_direct" and \
                _vmem_bytes("lhs_direct", 1, tl, L_pad, L_pad, D, O_pad, isz, osz) > budget:
            path = "lhs_ktiled"                                 # resident x block too big: stream it

    if path == "lhs_ktiled":
        L_pad = _round_up(L, 128)                               # k tiling needs 128-aligned blocks
        tl_cands = _divisors_mult(L_pad, 128, max(row_tile_max, 128)) or [128]
        tl = tl_cands[0]
        tk = None
        for cand in _divisors_mult(L_pad, 128, min(L_pad, 2048)):
            if _vmem_bytes("lhs_ktiled", 1, tl, cand, L_pad, D, O_pad, isz, osz) <= budget:
                tk = cand
                break
        if tk is None:
            tk = 128
            # TODO(synk): also tile D for extremely large feature dims.
        if _force_tk is not None:
            tk = _force_tk

    n_row_tiles = L_pad // tl
    n_k_tiles = L_pad // tk

    # ---- pad L only when required ---------------------------------------------------------------
    if L_pad != L:
        inputs = jnp.pad(inputs, ((0, 0), (0, L_pad - L), (0, 0)))
        adjs = jnp.pad(adjs, ((0, 0), (0, L_pad - L), (0, L_pad - L)))

    # ---- batch tile: largest that fits; allow a non-divisor (pad B) only if clearly better -------
    def _fits(bt):
        return _vmem_bytes(path, bt, tl, tk, L_pad, D, O_pad, isz, osz) <= budget

    bt_any = 1
    for cand in range(min(B, 1024), 0, -1):
        if _fits(cand):
            bt_any = cand
            break
    bt_div = 1
    for cand in range(bt_any, 0, -1):
        if B % cand == 0 and _fits(cand):
            bt_div = cand
            break
    if bt_any >= 2 * bt_div:
        Bt, B_pad = bt_any, _round_up(B, bt_any)
    else:
        Bt, B_pad = bt_div, B
    if B_pad != B:
        inputs = jnp.pad(inputs, ((0, B_pad - B), (0, 0), (0, 0)))
        adjs = jnp.pad(adjs, ((0, B_pad - B), (0, 0), (0, 0)))
    n_batch_tiles = B_pad // Bt

    # ---- grid / specs per path --------------------------------------------------------------------
    if path == "lhs_ktiled":
        grid = (n_batch_tiles, n_row_tiles, n_k_tiles)
        in_specs = [
            pl.BlockSpec((Bt, tk, D), lambda b, r, k: (b, k, 0)),       # x streamed over k
            pl.BlockSpec((Bt, tl, tk), lambda b, r, k: (b, r, k)),      # adj row+k tiled
            pl.BlockSpec((D, O_pad), lambda b, r, k: (0, 0)),
            pl.BlockSpec((1, O_pad), lambda b, r, k: (0, 0)),
        ]
        out_specs = pl.BlockSpec((Bt, tl, O_pad), lambda b, r, k: (b, r, 0))
        scratch = [pltpu.VMEM((Bt, tl, D), jnp.float32),
                   pltpu.VMEM((Bt, tl, 1), jnp.float32)]
        semantics = ("parallel", "parallel", "arbitrary")               # batch stays parallel (megacore)
        kernel = _lhs_ktiled_kernel
    else:
        grid = (n_batch_tiles, n_row_tiles)
        in_specs = [
            # x: full (padded) L x D per batch tile; block index independent of the row axis,
            # so the pipeline keeps it resident across row tiles (no re-DMA).
            pl.BlockSpec((Bt, L_pad, D), lambda b, r: (b, 0, 0)),
            pl.BlockSpec((Bt, tl, L_pad), lambda b, r: (b, r, 0)),
            pl.BlockSpec((D, O_pad), lambda b, r: (0, 0)),
            pl.BlockSpec((1, O_pad), lambda b, r: (0, 0)),
        ]
        out_specs = pl.BlockSpec((Bt, tl, O_pad), lambda b, r: (b, r, 0))
        if path == "rhs_cached":
            scratch = [pltpu.VMEM((Bt, L_pad, O_pad), inputs.dtype)]
            # row axis must be "arbitrary": the support scratch is built at r == 0 and reused.
            semantics = ("parallel", "arbitrary")
            kernel = _rhs_cached_kernel
        else:
            scratch = []
            semantics = ("parallel", "parallel")
            kernel = _lhs_direct_kernel

    out_padded = pl.pallas_call(
        kernel,
        out_shape=jax.ShapeDtypeStruct((B_pad, L_pad, O_pad), out_dtype),
        grid_spec=pltpu.PrefetchScalarGridSpec(
            num_scalar_prefetch=0,
            grid=grid,
            in_specs=in_specs,
            out_specs=out_specs,
            scratch_shapes=scratch,
        ),
        compiler_params=pltpu.CompilerParams(
            dimension_semantics=semantics,
            vmem_limit_bytes=vmem_limit,
        ),
    )(inputs, adjs, w_p, b_p)

    if (B_pad, L_pad, O_pad) != (B, L, O):
        out_padded = out_padded[:B, :L, :O]
    return out_padded


# --------------------------------------------------------------------------------------- tests
if __name__ == "__main__":
    key = jax.random.PRNGKey(0)

    def _make(k, B, L, D, O):
        k_x, k_adj, k_w, k_b = jax.random.split(k, 4)
        bound = 1.0 / (D ** 0.5)
        x = jax.random.normal(k_x, (B, L, D), dtype=jnp.float32)
        adj = jax.random.uniform(k_adj, (B, L, L), dtype=jnp.float32)
        w = jax.random.uniform(k_w, (O, D), minval=-bound, maxval=bound, dtype=jnp.float32)
        b = jax.random.uniform(k_b, (O,), minval=-bound, maxval=bound, dtype=jnp.float32)
        return x, adj, w, b

    def _reference(x, adj, w, b):
        support = jnp.einsum("bld,od->blo", x, w) + b[None, None, :]
        return jnp.einsum("bkl,blo->bko", adj, support)

    # 1) small, D <= O_pad  -> lhs_direct path
    key, k1 = jax.random.split(key)
    x, adj, w, b = _make(k1, 2, 8, 32, 16)
    out = jax.block_until_ready(graph_convolution(x, adj, w, b))
    assert out.shape == (2, 8, 16)
    assert jnp.allclose(out, _reference(x, adj, w, b), atol=1e-4, rtol=1e-4)

    # 2) D > O_pad, ragged L (padding path) -> rhs_cached, single row tile
    key, k2 = jax.random.split(key)
    x, adj, w, b = _make(k2, 2, 10, 160, 8)
    out = jax.block_until_ready(graph_convolution(x, adj, w, b))
    assert out.shape == (2, 10, 8)
    assert jnp.allclose(out, _reference(x, adj, w, b), atol=1e-4, rtol=1e-4)

    # 3) D > O_pad with multiple row tiles -> support computed once at r == 0 and reused
    key, k3 = jax.random.split(key)
    x, adj, w, b = _make(k3, 2, 256, 160, 8)
    out = jax.block_until_ready(graph_convolution(x, adj, w, b, row_tile_max=128))
    assert out.shape == (2, 256, 8)
    assert jnp.allclose(out, _reference(x, adj, w, b), atol=2e-3, rtol=2e-3)

    # 4) forced contraction-tiled fallback path (x streamed over k with f32 accumulator)
    key, k4 = jax.random.split(key)
    x, adj, w, b = _make(k4, 2, 256, 32, 16)
    out = jax.block_until_ready(
        graph_convolution(x, adj, w, b, _force_path="lhs_ktiled", _force_tk=128))
    assert out.shape == (2, 256, 16)
    assert jnp.allclose(out, _reference(x, adj, w, b), atol=2e-3, rtol=2e-3)

    # 5) bf16 fast path (f32 accumulation); loose tolerance vs the f32 reference
    key, k5 = jax.random.split(key)
    x, adj, w, b = _make(k5, 2, 24, 64, 32)
    out = jax.block_until_ready(graph_convolution(x, adj, w, b, compute_dtype=jnp.bfloat16))
    assert out.shape == (2, 24, 32)
    assert jnp.allclose(out, _reference(x, adj, w, b), atol=0.3, rtol=0.05)

    print("KERNEL_OK")
</pallas_src>

<mosaic_0001>
module attributes {stable_mosaic.version = 11 : i64} {
  func.func @_lhs_direct_kernel(%arg0: i32, %arg1: i32, %arg2: memref<2x8x32xf32, #tpu.memory_space<vmem>>, %arg3: memref<2x8x8xf32, #tpu.memory_space<vmem>>, %arg4: memref<32x128xf32, #tpu.memory_space<vmem>>, %arg5: memref<1x128xf32, #tpu.memory_space<vmem>>, %arg6: memref<2x8x128xf32, #tpu.memory_space<vmem>>) attributes {dimension_semantics = [#tpu.dimension_semantics<parallel>, #tpu.dimension_semantics<parallel>], iteration_bounds = array<i64: 1, 1>, scalar_prefetch = 0 : i64, scratch_operands = 0 : i64, tpu.core_type = #tpu.core_type<tc>, window_params = [{transform_indices = @transform_0, window_bounds = array<i64: 2, 8, 32>}, {transform_indices = @transform_1, window_bounds = array<i64: 2, 8, 8>}, {pipeline_mode = #tpu.pipeline_mode<synchronous>, transform_indices = @transform_2, window_bounds = array<i64: 32, 128>}, {pipeline_mode = #tpu.pipeline_mode<synchronous>, transform_indices = @transform_3, window_bounds = array<i64: 1, 128>}, {transform_indices = @transform_4, window_bounds = array<i64: 2, 8, 128>}]} {
    %c0 = arith.constant 0 : index
    %c0_0 = arith.constant 0 : index
    %c0_1 = arith.constant 0 : index
    %0 = vector.load %arg2[%c0, %c0_0, %c0_1] : memref<2x8x32xf32, #tpu.memory_space<vmem>>, vector<2x8x32xf32>
    %c0_2 = arith.constant 0 : index
    %c0_3 = arith.constant 0 : index
    %c0_4 = arith.constant 0 : index
    %1 = vector.load %arg3[%c0_2, %c0_3, %c0_4] : memref<2x8x8xf32, #tpu.memory_space<vmem>>, vector<2x8x8xf32>
    %c0_5 = arith.constant 0 : index
    %c0_6 = arith.constant 0 : index
    %2 = vector.load %arg4[%c0_5, %c0_6] : memref<32x128xf32, #tpu.memory_space<vmem>>, vector<32x128xf32>
    "tpu.trace_start"() <{level = 10 : i32, message = "btl,bld->btd"}> : () -> ()
    %cst = arith.constant dense<0.000000e+00> : vector<2x8x32xf32>
    %3 = tpu.matmul %1, %0, %cst {dimension_numbers = #tpu.dot_dimension_numbers<[2], [1], [1], [2], [0, 0, 0, 1, 1, 2], [0], [0]>} : vector<2x8x8xf32>, vector<2x8x32xf32>, vector<2x8x32xf32> -> vector<2x8x32xf32>
    "tpu.trace_stop"() : () -> ()
    "tpu.trace_start"() <{level = 10 : i32, message = "btd,do->bto"}> : () -> ()
    %cst_7 = arith.constant dense<0.000000e+00> : vector<2x8x128xf32>
    %4 = tpu.matmul %3, %2, %cst_7 {dimension_numbers = #tpu.dot_dimension_numbers<[2], [0], [0, 1], [1], [0, 0, 0, 1, 1, 1], [], []>} : vector<2x8x32xf32>, vector<32x128xf32>, vector<2x8x128xf32> -> vector<2x8x128xf32>
    "tpu.trace_stop"() : () -> ()
    %cst_8 = arith.constant dense<0.000000e+00> : vector<2x8xf32>
    %5 = vector.multi_reduction <add>, %1, %cst_8 [2] : vector<2x8x8xf32> to vector<2x8xf32>
    %6 = vector.shape_cast %5 : vector<2x8xf32> to vector<2x8x1xf32>
    %c0_9 = arith.constant 0 : index
    %c0_10 = arith.constant 0 : index
    %7 = vector.load %arg5[%c0_9, %c0_10] : memref<1x128xf32, #tpu.memory_space<vmem>>, vector<1x128xf32>
    %8 = vector.shape_cast %7 : vector<1x128xf32> to vector<1x1x128xf32>
    %9 = vector.broadcast %6 : vector<2x8x1xf32> to vector<2x8x128xf32>
    %10 = vector.broadcast %8 : vector<1x1x128xf32> to vector<2x8x128xf32>
    %11 = arith.mulf %9, %10 : vector<2x8x128xf32>
    %12 = arith.addf %4, %11 : vector<2x8x128xf32>
    %c0_11 = arith.constant 0 : index
    %c0_12 = arith.constant 0 : index
    %c0_13 = arith.constant 0 : index
    %13 = vector.load %arg6[%c0_11, %c0_12, %c0_13] : memref<2x8x128xf32, #tpu.memory_space<vmem>>, vector<2x8x128xf32>
    tpu.vector_store %arg6[%c0_11, %c0_12, %c0_13], %12 {strides = array<i32>} : memref<2x8x128xf32, #tpu.memory_space<vmem>>, vector<2x8x128xf32>,
    return
  }
  func.func @transform_0(%arg0: i32, %arg1: i32) -> (i32, i32, i32) {
    %c0_i32 = arith.constant 0 : i32
    %c0_i32_0 = arith.constant 0 : i32
    %c0_i32_1 = arith.constant 0 : i32
    return %arg0, %c0_i32, %c0_i32_0 : i32, i32, i32
  }
  func.func @transform_1(%arg0: i32, %arg1: i32) -> (i32, i32, i32) {
    %c0_i32 = arith.constant 0 : i32
    %c0_i32_0 = arith.constant 0 : i32
    return %arg0, %arg1, %c0_i32 : i32, i32, i32
  }
  func.func @transform_2(%arg0: i32, %arg1: i32) -> (i32, i32) {
    %c0_i32 = arith.constant 0 : i32
    %c0_i32_0 = arith.constant 0 : i32
    %c0_i32_1 = arith.constant 0 : i32
    return %c0_i32, %c0_i32_0 : i32, i32
  }
  func.func @transform_3(%arg0: i32, %arg1: i32) -> (i32, i32) {
    %c0_i32 = arith.constant 0 : i32
    %c0_i32_0 = arith.constant 0 : i32
    %c0_i32_1 = arith.constant 0 : i32
    return %c0_i32, %c0_i32_0 : i32, i32
  }
  func.func @transform_4(%arg0: i32, %arg1: i32) -> (i32, i32, i32) {
    %c0_i32 = arith.constant 0 : i32
    %c0_i32_0 = arith.constant 0 : i32
    return %arg0, %arg1, %c0_i32 : i32, i32, i32
  }
}

</mosaic_0001>

<llo_original>
// kernel: tpu_custom_call.1
$region0: #{tpu_custom_call.1}
  #allocation0 [shape = 'u32[]', space=smem, size = 0x4, offset = 0x4, fixed_abs, tag = 'smem constant byte address 0x4 - core index']
  #allocation1 [shape = 'u32[144,128]{1,0:T(1,128)}', space=vmem, size = 0x12000, scoped, tag = 'internal scratch']
  %s0 = inlined_call_operand.hbm [shape: f32[2,8,32], index: 0, kind: input, shape index: {}]
  %s1 = inlined_call_operand.hbm [shape: f32[2,8,8], index: 1, kind: input, shape index: {}]
  %s2 = inlined_call_operand.hbm [shape: f32[32,128], index: 2, kind: input, shape index: {}]
  %s3 = inlined_call_operand.vmem [shape: f32[1,128], index: 3, kind: input, shape index: {}]
  %s4 = inlined_call_operand.hbm [shape: f32[2,8,128], index: 4, kind: output, shape index: {}]
  %s5 = sld [smem:[#allocation0]]
  $region38: #{tpu_custom_call.1} parent=0
    _
  %s7 = ssub.s32 1, %s5
  %s8 = scalar_select 0, %s7, %s5
  $region1: #{tpu_custom_call.1} parent=0
    #allocation2 [shape = 'u8[8192]{0}', space=vmem, size = 0x2000, scoped, tag = 'input window, operand 0, single buffered']
    #allocation3 [shape = 's32[1]{0}', space=sflag, size = 0x4, scoped, tag = 'scoped memory for tpu_custom_call.1']
    #allocation4 [shape = 's32[1]{0}', space=sflag, size = 0x4, scoped, tag = 'scoped memory for tpu_custom_call.1']
    #allocation5 [shape = 'u8[8192]{0}', space=vmem, size = 0x2000, scoped, tag = 'input window, operand 1, single buffered']
    #allocation6 [shape = 's32[1]{0}', space=sflag, size = 0x4, scoped, tag = 'scoped memory for tpu_custom_call.1']
    #allocation7 [shape = 'u8[16384]{0}', space=vmem, size = 0x4000, scoped, tag = 'input window, operand 2, single buffered']
    #allocation8 [shape = 'u8[8192]{0}', space=vmem, size = 0x2000, scoped, tag = 'output window, operand 0, single buffered']
    %9 = vsyncpa [#allocation3], 0
    %10 = vsyncpa [#allocation6], 0
    %11 = vsyncpa [#allocation4], 0
    // Predicated region
    $region2: #{tpu_custom_call.1} parent=1 // pred_check
      _
    $region3: #{tpu_custom_call.1} parent=1 // pred_check_branch
      %13 = sbr.rel (0) target = $region5
    $region4: #{tpu_custom_call.1} parent=1 // pred_region
      %s15 = ssub.s32 256, 256
      %16 = vsyncadd [#allocation3], %s15
      %s17 = sshll.u32 [#allocation2], 4
      %s18 = int_to_ptr.vmem [resolvable:$true] %s17
      %23 = dma.hbm_to_vmem [thread:$0]  %s0, 256, %s18, [#allocation3], 128, 128, 8
    $region5: #{tpu_custom_call.1} parent=1 // pred_fallthru
      _
    // Predicated region
    $region6: #{tpu_custom_call.1} parent=1 // pred_check
      _
    $region7: #{tpu_custom_call.1} parent=1 // pred_check_branch
      %25 = sbr.rel (0) target = $region9
    $region8: #{tpu_custom_call.1} parent=1 // pred_region
      %s27 = ssub.s32 256, 256
      %28 = vsyncadd [#allocation6], %s27
      %s29 = sshll.u32 [#allocation5], 4
      %s30 = int_to_ptr.vmem [resolvable:$true] %s29
      %35 = dma.hbm_to_vmem [thread:$0]  %s1, 256, %s30, [#allocation6], 128, 128, 8
    $region9: #{tpu_custom_call.1} parent=1 // pred_fallthru
      _
    // Predicated region
    $region10: #{tpu_custom_call.1} parent=1 // pred_check
      _
    $region11: #{tpu_custom_call.1} parent=1 // pred_check_branch
      %37 = sbr.rel (0) target = $region13
    $region12: #{tpu_custom_call.1} parent=1 // pred_region
      %s39 = ssub.s32 512, 512
      %40 = vsyncadd [#allocation6], %s39
      %s41 = sshll.u32 [#allocation7], 4
      %s42 = int_to_ptr.vmem [resolvable:$true] %s41
      %47 = dma.hbm_to_vmem [thread:$0]  %s2, 512, %s42, [#allocation6], 128, 128, 8
    $region13: #{tpu_custom_call.1} parent=1 // pred_fallthru
      _
    // Predicated region
    $region14: #{tpu_custom_call.1} parent=1 // pred_check
      _
    $region15: #{tpu_custom_call.1} parent=1 // pred_check_branch
      %49 = sbr.rel (0) target = $region17
    $region16: #{tpu_custom_call.1} parent=1 // pred_region
      _
    $region17: #{tpu_custom_call.1} parent=1 // pred_fallthru
      _
    // Predicated region
    $region18: #{tpu_custom_call.1} parent=1 // pred_check
      _
    $region19: #{tpu_custom_call.1} parent=1 // pred_check_branch
      %51 = sbr.rel (0) target = $region21
    $region20: #{tpu_custom_call.1} parent=1 // pred_region
      %52 = dma.done [#allocation3], 256
    $region21: #{tpu_custom_call.1} parent=1 // pred_fallthru
      _
    // Predicated region
    $region22: #{tpu_custom_call.1} parent=1 // pred_check
      _
    $region23: #{tpu_custom_call.1} parent=1 // pred_check_branch
      %54 = sbr.rel (0) target = $region25
    $region24: #{tpu_custom_call.1} parent=1 // pred_region
      %55 = dma.done [#allocation6], 256
    $region25: #{tpu_custom_call.1} parent=1 // pred_fallthru
      _
    // Predicated region
    $region26: #{tpu_custom_call.1} parent=1 // pred_check
      _
    $region27: #{tpu_custom_call.1} parent=1 // pred_check_branch
      %57 = sbr.rel (0) target = $region29
    $region28: #{tpu_custom_call.1} parent=1 // pred_region
      %58 = dma.done [#allocation6], 512
    $region29: #{tpu_custom_call.1} parent=1 // pred_fallthru
      _
    %v59 = vld [vmem:[#allocation2] sm:$0xff]
    %v60 = vld [vmem:[#allocation2 + $0x8] sm:$0xff]
    %v61 = vld [vmem:[#allocation5] sm:$0xff]
    %v62 = vld [vmem:[#allocation5 + $0x8] sm:$0xff]
    %v63 = vld [vmem:[#allocation7] sm:$0xff]
    %v64 = vld [vmem:[#allocation7 + $0x8] sm:$0xff]
    %v65 = vld [vmem:[#allocation7 + $0x10] sm:$0xff]
    %v66 = vld [vmem:[#allocation7 + $0x18] sm:$0xff]
    %vm67 = vcmask 64512
    %v69 = vsel %vm67, %v61, 0
    %71 = vmatprep.subr.mxu0 0.0
    %72 = vmatpush1.msra.mxu0 %v59
    %73 = vmatprep.subr.mxu0 0.0
    %74 = vmatpush1.msra.mxu0 0.0
    %75 = vmatprep.subr.mxu0 0.0
    %76 = vmatpush1.msra.mxu0 0.0
    %77 = vmatprep.subr.mxu0 0.0
    %78 = vmatpush1.msra.mxu0 0.0
    %79 = vmatprep.subr.mxu0 0.0
    %80 = vmatpush1.msra.mxu0 0.0
    %81 = vmatprep.subr.mxu0 0.0
    %82 = vmatpush1.msra.mxu0 0.0
    %83 = vmatprep.subr.mxu0 0.0
    %84 = vmatpush1.msra.mxu0 0.0
    %85 = vmatprep.subr.mxu0 0.0
    %86 = vmatpush1.msra.mxu0 0.0
    %87 = vmatprep.subr.mxu0 0.0
    %88 = vmatpush1.msra.mxu0 0.0
    %89 = vmatprep.subr.mxu0 0.0
    %90 = vmatpush1.msra.mxu0 0.0
    %91 = vmatprep.subr.mxu0 0.0
    %92 = vmatpush1.msra.mxu0 0.0
    %93 = vmatprep.subr.mxu0 0.0
    %94 = vmatpush1.msra.mxu0 0.0
    %95 = vmatprep.subr.mxu0 0.0
    %96 = vmatpush1.msra.mxu0 0.0
    %97 = vmatprep.subr.mxu0 0.0
    %98 = vmatpush1.msra.mxu0 0.0
    %99 = vmatprep.subr.mxu0 0.0
    %100 = vmatpush1.msra.mxu0 0.0
    %101 = vmatprep.subr.mxu0 0.0
    %102 = vmatpush1.msra.mxu0 0.0
    %103 = vmatprep.subr.mxu0 0.0
    %104 = vmatpush1.msra.mxu0 0.0
    %105 = vmatprep.subr.mxu0 0.0
    %106 = vmatpush1.msra.mxu0 0.0
    %107 = vmatprep.subr.mxu0 0.0
    %108 = vmatpush1.msra.mxu0 0.0
    %109 = vmatprep.subr.mxu0 0.0
    %110 = vmatpush1.msra.mxu0 0.0
    %111 = vmatprep.subr.mxu0 0.0
    %112 = vmatpush1.msra.mxu0 0.0
    %113 = vmatprep.subr.mxu0 0.0
    %114 = vmatpush1.msra.mxu0 0.0
    %115 = vmatprep.subr.mxu0 0.0
    %116 = vmatpush1.msra.mxu0 0.0
    %117 = vmatprep.subr.mxu0 0.0
    %118 = vmatpush1.msra.mxu0 0.0
    %119 = vmatprep.subr.mxu0 0.0
    %120 = vmatpush1.msra.mxu0 0.0
    %121 = vmatprep.subr.mxu0 0.0
    %122 = vmatpush1.msra.mxu0 0.0
    %123 = vmatprep.subr.mxu0 0.0
    %124 = vmatpush1.msra.mxu0 0.0
    %125 = vmatprep.subr.mxu0 0.0
    %126 = vmatpush1.msra.mxu0 0.0
    %127 = vmatprep.subr.mxu0 0.0
    %128 = vmatpush1.msra.mxu0 0.0
    %129 = vmatprep.subr.mxu0 0.0
    %130 = vmatpush1.msra.mxu0 0.0
    %131 = vmatprep.subr.mxu0 0.0
    %132 = vmatpush1.msra.mxu0 0.0
    %133 = vmatprep.subr.mxu0 0.0
    %134 = vmatpush1.msra.mxu0 0.0
    %135 = vmatprep.mubr.f32.mxu0 0.0
    %136 = vmatmul.mubr.f32.gmra.mrb[0].mxu0 %v69
    %v137 = vpop.f32.mrb[0].mxu0
    %v138 = vadd.f32 0.0, %v137
    %v139 = vpop.f32.mrb[0].mxu0
    %140 = vdwg.mxu0
    %v142 = vsel %vm67, %v62, 0
    %144 = vmatprep.subr.mxu0 0.0
    %145 = vmatpush1.msra.mxu0 %v60
    %146 = vmatprep.subr.mxu0 0.0
    %147 = vmatpush1.msra.mxu0 0.0
    %148 = vmatprep.subr.mxu0 0.0
    %149 = vmatpush1.msra.mxu0 0.0
    %150 = vmatprep.subr.mxu0 0.0
    %151 = vmatpush1.msra.mxu0 0.0
    %152 = vmatprep.subr.mxu0 0.0
    %153 = vmatpush1.msra.mxu0 0.0
    %154 = vmatprep.subr.mxu0 0.0
    %155 = vmatpush1.msra.mxu0 0.0
    %156 = vmatprep.subr.mxu0 0.0
    %157 = vmatpush1.msra.mxu0 0.0
    %158 = vmatprep.subr.mxu0 0.0
    %159 = vmatpush1.msra.mxu0 0.0
    %160 = vmatprep.subr.mxu0 0.0
    %161 = vmatpush1.msra.mxu0 0.0
    %162 = vmatprep.subr.mxu0 0.0
    %163 = vmatpush1.msra.mxu0 0.0
    %164 = vmatprep.subr.mxu0 0.0
    %165 = vmatpush1.msra.mxu0 0.0
    %166 = vmatprep.subr.mxu0 0.0
    %167 = vmatpush1.msra.mxu0 0.0
    %168 = vmatprep.subr.mxu0 0.0
    %169 = vmatpush1.msra.mxu0 0.0
    %170 = vmatprep.subr.mxu0 0.0
    %171 = vmatpush1.msra.mxu0 0.0
    %172 = vmatprep.subr.mxu0 0.0
    %173 = vmatpush1.msra.mxu0 0.0
    %174 = vmatprep.subr.mxu0 0.0
    %175 = vmatpush1.msra.mxu0 0.0
    %176 = vmatprep.subr.mxu0 0.0
    %177 = vmatpush1.msra.mxu0 0.0
    %178 = vmatprep.subr.mxu0 0.0
    %179 = vmatpush1.msra.mxu0 0.0
    %180 = vmatprep.subr.mxu0 0.0
    %181 = vmatpush1.msra.mxu0 0.0
    %182 = vmatprep.subr.mxu0 0.0
    %183 = vmatpush1.msra.mxu0 0.0
    %184 = vmatprep.subr.mxu0 0.0
    %185 = vmatpush1.msra.mxu0 0.0
    %186 = vmatprep.subr.mxu0 0.0
    %187 = vmatpush1.msra.mxu0 0.0
    %188 = vmatprep.subr.mxu0 0.0
    %189 = vmatpush1.msra.mxu0 0.0
    %190 = vmatprep.subr.mxu0 0.0
    %191 = vmatpush1.msra.mxu0 0.0
    %192 = vmatprep.subr.mxu0 0.0
    %193 = vmatpush1.msra.mxu0 0.0
    %194 = vmatprep.subr.mxu0 0.0
    %195 = vmatpush1.msra.mxu0 0.0
    %196 = vmatprep.subr.mxu0 0.0
    %197 = vmatpush1.msra.mxu0 0.0
    %198 = vmatprep.subr.mxu0 0.0
    %199 = vmatpush1.msra.mxu0 0.0
    %200 = vmatprep.subr.mxu0 0.0
    %201 = vmatpush1.msra.mxu0 0.0
    %202 = vmatprep.subr.mxu0 0.0
    %203 = vmatpush1.msra.mxu0 0.0
    %204 = vmatprep.subr.mxu0 0.0
    %205 = vmatpush1.msra.mxu0 0.0
    %206 = vmatprep.subr.mxu0 0.0
    %207 = vmatpush1.msra.mxu0 0.0
    %208 = vmatprep.mubr.f32.mxu0 0.0
    %209 = vmatmul.mubr.f32.gmra.mrb[0].mxu0 %v142
    %v210 = vpop.f32.mrb[0].mxu0
    %v211 = vadd.f32 0.0, %v210
    %v212 = vpop.f32.mrb[0].mxu0
    %213 = vdwg.mxu0
    %v214 = vsel %vm67, %v61, 0.0
    %215 = vadd.xlane.f32.xlu0 %v214
    %v216 = vpop.xlane.xlu0 %215
    %v217 = vsel %vm67, %v62, 0.0
    %218 = vadd.xlane.f32.xlu0 %v217
    %v219 = vpop.xlane.xlu0 %218
    %v220 = vld [vmem:[%s3] sm:$0x1]
    %v222 = vlaneseq
    %v223 = vshrl.u32 %v222, 7
    %v224 = vsub.s32 0, %v223
    %v225 = vrot.slane %v220, %v224
    %v227 = vmul.f32 %v216, %v225
    %v228 = vmul.f32 %v219, %v225
    %vm229 = vcmask 261120
    %v231 = vsel %vm229, %v138, 0
    %v234 = vsel %vm229, %v211, 0
    %236 = vmatprep.subr.mxu0 0.0
    %237 = vmatpush1.msra.mxu0 %v63
    %238 = vmatprep.subr.mxu0 0.0
    %239 = vmatpush1.msra.mxu0 %v64
    %240 = vmatprep.subr.mxu0 0.0
    %241 = vmatpush1.msra.mxu0 %v65
    %242 = vmatprep.subr.mxu0 0.0
    %243 = vmatpush1.msra.mxu0 %v66
    %244 = vmatprep.subr.mxu0 0.0
    %245 = vmatpush1.msra.mxu0 0.0
    %246 = vmatprep.subr.mxu0 0.0
    %247 = vmatpush1.msra.mxu0 0.0
    %248 = vmatprep.subr.mxu0 0.0
    %249 = vmatpush1.msra.mxu0 0.0
    %250 = vmatprep.subr.mxu0 0.0
    %251 = vmatpush1.msra.mxu0 0.0
    %252 = vmatprep.subr.mxu0 0.0
    %253 = vmatpush1.msra.mxu0 0.0
    %254 = vmatprep.subr.mxu0 0.0
    %255 = vmatpush1.msra.mxu0 0.0
    %256 = vmatprep.subr.mxu0 0.0
    %257 = vmatpush1.msra.mxu0 0.0
    %258 = vmatprep.subr.mxu0 0.0
    %259 = vmatpush1.msra.mxu0 0.0
    %260 = vmatprep.subr.mxu0 0.0
    %261 = vmatpush1.msra.mxu0 0.0
    %262 = vmatprep.subr.mxu0 0.0
    %263 = vmatpush1.msra.mxu0 0.0
    %264 = vmatprep.subr.mxu0 0.0
    %265 = vmatpush1.msra.mxu0 0.0
    %266 = vmatprep.subr.mxu0 0.0
    %267 = vmatpush1.msra.mxu0 0.0
    %268 = vmatprep.subr.mxu0 0.0
    %269 = vmatpush1.msra.mxu0 0.0
    %270 = vmatprep.subr.mxu0 0.0
    %271 = vmatpush1.msra.mxu0 0.0
    %272 = vmatprep.subr.mxu0 0.0
    %273 = vmatpush1.msra.mxu0 0.0
    %274 = vmatprep.subr.mxu0 0.0
    %275 = vmatpush1.msra.mxu0 0.0
    %276 = vmatprep.subr.mxu0 0.0
    %277 = vmatpush1.msra.mxu0 0.0
    %278 = vmatprep.subr.mxu0 0.0
    %279 = vmatpush1.msra.mxu0 0.0
    %280 = vmatprep.subr.mxu0 0.0
    %281 = vmatpush1.msra.mxu0 0.0
    %282 = vmatprep.subr.mxu0 0.0
    %283 = vmatpush1.msra.mxu0 0.0
    %284 = vmatprep.subr.mxu0 0.0
    %285 = vmatpush1.msra.mxu0 0.0
    %286 = vmatprep.subr.mxu0 0.0
    %287 = vmatpush1.msra.mxu0 0.0
    %288 = vmatprep.subr.mxu0 0.0
    %289 = vmatpush1.msra.mxu0 0.0
    %290 = vmatprep.subr.mxu0 0.0
    %291 = vmatpush1.msra.mxu0 0.0
    %292 = vmatprep.subr.mxu0 0.0
    %293 = vmatpush1.msra.mxu0 0.0
    %294 = vmatprep.subr.mxu0 0.0
    %295 = vmatpush1.msra.mxu0 0.0
    %296 = vmatprep.subr.mxu0 0.0
    %297 = vmatpush1.msra.mxu0 0.0
    %298 = vmatprep.subr.mxu0 0.0
    %299 = vmatpush1.msra.mxu0 0.0
    %300 = vmatprep.mubr.f32.mxu0 0.0
    %301 = vmatmul.mubr.f32.gmra.mrb[0].mxu0 %v231
    %v302 = vpop.f32.mrb[0].mxu0
    %v303 = vadd.f32 %v227, %v302
    %v304 = vpop.f32.mrb[0].mxu0
    %305 = vmatprep.mubr.f32.mxu0 0.0
    %306 = vmatmul.mubr.f32.gmra.mrb[0].mxu0 %v234
    %v307 = vpop.f32.mrb[0].mxu0
    %v308 = vadd.f32 %v228, %v307
    %v309 = vpop.f32.mrb[0].mxu0
    %310 = vdwg.mxu0
    %311 = vst [vmem:[#allocation8] sm:$0xff] %v303
    %312 = vst [vmem:[#allocation8 + $0x8] sm:$0xff] %v308
    // Predicated region
    $region30: #{tpu_custom_call.1} parent=1 // pred_check
      _
    $region31: #{tpu_custom_call.1} parent=1 // pred_check_branch
      %314 = sbr.rel (0) target = $region33
    $region32: #{tpu_custom_call.1} parent=1 // pred_region
      %s316 = ssub.s32 256, 256
      %317 = vsyncadd [#allocation4], %s316
      %s318 = sshll.u32 [#allocation8], 4
      %s319 = int_to_ptr.vmem [resolvable:$true] %s318
      %324 = dma.vmem_to_hbm [thread:$0]  %s319, 256, %s4, [#allocation4], 128, 128, 8
    $region33: #{tpu_custom_call.1} parent=1 // pred_fallthru
      _
    // Predicated region
    $region34: #{tpu_custom_call.1} parent=1 // pred_check
      _
    $region35: #{tpu_custom_call.1} parent=1 // pred_check_branch
      %326 = sbr.rel (0) target = $region37
    $region36: #{tpu_custom_call.1} parent=1 // pred_region
      %327 = dma.done [#allocation4], 256
    $region37: #{tpu_custom_call.1} parent=1 // pred_fallthru
      _
    %328 = vsyncpa [#allocation3], 1
    %329 = vsyncpa [#allocation6], 1
    %330 = vsyncpa [#allocation4], 1

</llo_original>
